<compile_context>
chip_gen: v6e
topology: v6e:2x2x1
jax: 0.10.0
libtpu: 0.0.40
codegen_flags: <defaults>
</compile_context>

<pallas_src>
import jax
import jax.numpy as jnp
from jax.experimental import pallas as pl
from jax.experimental.pallas import tpu as pltpu

LANE = 128


def _round_up(n, m):
    return (n + m - 1) // m * m


# ----------------------------------------------------------------------------
# Capability probe: single-buffered (grid-invariant) weight inputs.
# ----------------------------------------------------------------------------
_BUFFERED1_OK = None


def _probe_copy_kernel(x_ref, o_ref):
    o_ref[...] = x_ref[...]


def _single_buffer_ok():
    """Probe once whether pipeline_mode=pl.Buffered(1) lowers on this JAX/Mosaic."""
    global _BUFFERED1_OK
    if _BUFFERED1_OK is None:
        try:
            spec = pl.BlockSpec((8, LANE), lambda i: (0, 0),
                                pipeline_mode=pl.Buffered(1))
            x = jnp.arange(8 * LANE, dtype=jnp.float32).reshape(8, LANE)
            out = pl.pallas_call(
                _probe_copy_kernel,
                out_shape=jax.ShapeDtypeStruct((8, LANE), jnp.float32),
                grid=(1,),
                in_specs=[spec],
                out_specs=pl.BlockSpec((8, LANE), lambda i: (0, 0)),
            )(x)
            jax.block_until_ready(out)
            _BUFFERED1_OK = bool(jnp.array_equal(out, x))
        except Exception:
            _BUFFERED1_OK = False
    return _BUFFERED1_OK


# ----------------------------------------------------------------------------
# Kernels
# ----------------------------------------------------------------------------
def _ode_kernel(scal_ref,                 # SMEM (2,): [t, alpha]
                x_ref, h0_ref,            # (TB, F_pad) f32 activation tiles
                w1x_ref,                  # (F_pad, H_pad) bf16, VMEM-resident
                uv_ref,                   # (2, H_pad) f32: row0 = t-coeff u, row1 = bias v
                w2_ref,                   # (H_pad, F_pad) bf16, VMEM-resident
                b2_ref,                   # (1, F_pad) f32
                o_ref):                   # (TB, F_pad) f32 output tile
    t = scal_ref[0]
    alpha = scal_ref[1]

    # First linear on the MXU (bf16 in, f32 acc); folded time path is a VPU FMA.
    pre = jnp.dot(x_ref[...].astype(jnp.bfloat16), w1x_ref[...],
                  preferred_element_type=jnp.float32)
    pre = pre + t * uv_ref[0:1, :] + uv_ref[1:2, :]

    # Second linear on the MXU.
    net = jnp.dot(jnp.tanh(pre).astype(jnp.bfloat16), w2_ref[...],
                  preferred_element_type=jnp.float32)

    # Epilogue: x / h0 are (re-)read from VMEM only here -> short vreg live ranges.
    o_ref[...] = net + b2_ref[...] + alpha * (h0_ref[...] - x_ref[...])


def _rk4_kernel(scal_ref,                 # SMEM (3,): [t, dt, alpha]
                x_ref, h0_ref, w1x_ref, uv_ref, w2_ref, b2_ref, o_ref):
    t = scal_ref[0]
    dt = scal_ref[1]
    alpha = scal_ref[2]

    def rhs(tt, xx):
        pre = jnp.dot(xx.astype(jnp.bfloat16), w1x_ref[...],
                      preferred_element_type=jnp.float32)
        pre = pre + tt * uv_ref[0:1, :] + uv_ref[1:2, :]
        net = jnp.dot(jnp.tanh(pre).astype(jnp.bfloat16), w2_ref[...],
                      preferred_element_type=jnp.float32)
        return net + b2_ref[...] + alpha * (h0_ref[...] - xx)

    x = x_ref[...]
    half = dt * 0.5
    k1 = rhs(t, x)
    k2 = rhs(t + half, x + half * k1)
    k3 = rhs(t + half, x + half * k2)
    k4 = rhs(t + dt, x + dt * k3)
    o_ref[...] = x + (dt * (1.0 / 6.0)) * (k1 + 2.0 * (k2 + k3) + k4)


# ----------------------------------------------------------------------------
# Host-side parameter / state preparation (done once, outside the solver loop)
# ----------------------------------------------------------------------------
def prepare_params(params):
    """Fold the time path, zero-pad to lane width, cast weights to bf16. Call once."""
    F, H = params["w1x"].shape
    F_pad = _round_up(F, LANE)
    H_pad = _round_up(H, LANE)

    # Fold:  t_emb @ W1t = t*(wt @ W1t) + (bt @ W1t)
    u = params["wt"] @ params["w1t"]                      # (1, H)
    v = params["bt"] @ params["w1t"] + params["b1"]       # (1, H)
    uv = jnp.concatenate([u, v], axis=0)                  # (2, H) -> one small DMA

    def pad2(a, rows, cols):
        return jnp.pad(a, ((0, rows - a.shape[0]), (0, cols - a.shape[1])))

    return {
        "F": F, "H": H, "F_pad": F_pad, "H_pad": H_pad,
        "w1x": pad2(params["w1x"], F_pad, H_pad).astype(jnp.bfloat16),
        "w2":  pad2(params["w2"],  H_pad, F_pad).astype(jnp.bfloat16),
        "uv":  pad2(uv, 2, H_pad).astype(jnp.float32),
        "b2":  pad2(params["b2"], 1, F_pad).astype(jnp.float32),
        "alpha": jnp.asarray(params["alpha"], jnp.float32),
    }


def pad_state(a, prepped):
    """Zero-pad a (B, F) state array to (B_pad, F_pad). Do this ONCE outside the solver."""
    B, F = a.shape
    assert F == prepped["F"]
    B_pad = _round_up(B, 8)
    return jnp.pad(a.astype(jnp.float32),
                   ((0, B_pad - B), (0, prepped["F_pad"] - F)))


def unpad_state(a_p, B, F):
    return a_p[:B, :F]


# ----------------------------------------------------------------------------
# Launch helper
# ----------------------------------------------------------------------------
def _pick_tb(b_pad, tb):
    t = min(tb, b_pad)
    t -= t % 8
    t = max(t, 8)
    while b_pad % t:
        t -= 8
    # Prefer grid >= 2 so the ("parallel",) batch axis can shard across both v7x
    # TensorCores (weights are grid-invariant, so the extra step costs ~nothing).
    if b_pad // t < 2 and t >= 64 and t % 16 == 0:
        t //= 2
    return t


def _launch(kernel, scalars, x_p, h0_p, prepped, tb):
    B_pad, F_pad = x_p.shape
    H_pad = prepped["H_pad"]
    assert F_pad == prepped["F_pad"] and B_pad % 8 == 0
    assert h0_p.shape == x_p.shape

    TB = _pick_tb(B_pad, tb)
    grid = (B_pad // TB,)

    act_spec = pl.BlockSpec((TB, F_pad), lambda i: (i, 0))

    single_buf = _single_buffer_ok()

    def const_spec(shape):
        # Grid-invariant weights/biases: VMEM-resident, single-buffered if supported.
        if single_buf:
            return pl.BlockSpec(shape, lambda i: (0, 0), pipeline_mode=pl.Buffered(1))
        return pl.BlockSpec(shape, lambda i: (0, 0))

    # VMEM footprint estimate: resident weights + double-buffered activation tiles.
    wbytes = 2 * (F_pad * H_pad + H_pad * F_pad) * (1 if single_buf else 2)  # bf16
    sbytes = 4 * (2 * H_pad + F_pad) * (1 if single_buf else 2)              # uv + b2
    abytes = 3 * 2 * TB * F_pad * 4                                          # x, h0, out
    need = wbytes + sbytes + abytes
    vmem_limit = None
    if need > (24 << 20):  # only override when the scoped default would be tight
        vmem_limit = min(2 * need, 100 << 20)

    return pl.pallas_call(
        kernel,
        out_shape=jax.ShapeDtypeStruct((B_pad, F_pad), jnp.float32),
        grid=grid,
        in_specs=[
            pl.BlockSpec(memory_space=pltpu.MemorySpace.SMEM),   # scalars
            act_spec, act_spec,                                   # x, h0
            const_spec((F_pad, H_pad)),                           # w1x (bf16)
            const_spec((2, H_pad)),                               # uv  (f32)
            const_spec((H_pad, F_pad)),                           # w2  (bf16)
            const_spec((1, F_pad)),                               # b2  (f32)
        ],
        out_specs=act_spec,
        compiler_params=pltpu.CompilerParams(
            dimension_semantics=("parallel",),
            vmem_limit_bytes=vmem_limit),
    )(scalars, x_p, h0_p,
      prepped["w1x"], prepped["uv"], prepped["w2"], prepped["b2"])


# ----------------------------------------------------------------------------
# Public entry points
# ----------------------------------------------------------------------------
def ode_func_forward_padded(t, x_p, h0_p, prepped, *, tb=512):
    """Single RHS eval on pre-padded (B_pad, F_pad) state; returns the padded slab.

    Keep the solver state padded (pad_state once, unpad_state at the end) so no
    per-eval pad/slice copies are issued around this HBM-bound kernel."""
    scalars = jnp.stack([jnp.asarray(t, jnp.float32), prepped["alpha"]])
    return _launch(_ode_kernel, scalars, x_p, h0_p, prepped, tb)


def ode_func_forward(t, x, h0, prepped, *, tb=512):
    """Convenience wrapper matching ODEFunc.forward(t, x, h0) on (B, F) arrays.

    Passes through with zero copies when the state is already aligned
    (F % 128 == 0, B % 8 == 0); otherwise pads/slices around the padded path."""
    B, F = x.shape
    assert F == prepped["F"] and h0.shape == x.shape
    if F == prepped["F_pad"] and B % 8 == 0:
        return ode_func_forward_padded(t, x.astype(jnp.float32),
                                       h0.astype(jnp.float32), prepped, tb=tb)
    out_p = ode_func_forward_padded(t, pad_state(x, prepped), pad_state(h0, prepped),
                                    prepped, tb=tb)
    return out_p[:B, :F]


def ode_rk4_step_padded(t, dt, x_p, h0_p, prepped, *, tb=512):
    """One classical RK4 step fused into a single pallas_call (4 RHS evals, 8 matmuls).

    Weights are DMA'd HBM->VMEM once per solver step instead of once per RHS eval,
    and all intermediate stages stay on-chip. Operates on padded state slabs."""
    scalars = jnp.stack([jnp.asarray(t, jnp.float32),
                         jnp.asarray(dt, jnp.float32),
                         prepped["alpha"]])
    return _launch(_rk4_kernel, scalars, x_p, h0_p, prepped, tb)


# ----------------------------------------------------------------------------
# Pure-JAX references and parameter construction
# ----------------------------------------------------------------------------
def _reference(t, x, h0, params):
    """Mirrors the PyTorch forward exactly (f32)."""
    B = x.shape[0]
    t_col = jnp.full((B, 1), t, dtype=jnp.float32)
    t_emb = t_col * params["wt"] + params["bt"]                   # Linear(1, TED)
    xt = jnp.concatenate([x, t_emb], axis=-1)
    w1 = jnp.concatenate([params["w1x"], params["w1t"]], axis=0)  # (F+TED, H)
    h = jnp.tanh(xt @ w1 + params["b1"])
    net_out = h @ params["w2"] + params["b2"]
    return net_out + params["alpha"] * (h0 - x)


def _rk4_reference(t, dt, x, h0, params):
    f = lambda tt, xx: _reference(tt, xx, h0, params)
    k1 = f(t, x)
    k2 = f(t + dt / 2, x + dt / 2 * k1)
    k3 = f(t + dt / 2, x + dt / 2 * k2)
    k4 = f(t + dt, x + dt * k3)
    return x + dt / 6 * (k1 + 2 * k2 + 2 * k3 + k4)


def make_params(key, in_features, hidden_features, time_embed_dim):
    ks = jax.random.split(key, 7)
    f, h, ted = in_features, hidden_features, time_embed_dim
    scale = 0.1
    return {
        # time_embed: Linear(1, TED)
        "wt":  scale * jax.random.normal(ks[0], (1, ted), jnp.float32),
        "bt":  scale * jax.random.normal(ks[1], (1, ted), jnp.float32),
        # net[0]: Linear(F+TED, H) split & pre-transposed: (F, H) and (TED, H)
        "w1x": scale * jax.random.normal(ks[2], (f, h), jnp.float32),
        "w1t": scale * jax.random.normal(ks[3], (ted, h), jnp.float32),
        "b1":  scale * jax.random.normal(ks[4], (1, h), jnp.float32),
        # net[2]: Linear(H, F) pre-transposed: (H, F)
        "w2":  scale * jax.random.normal(ks[5], (h, f), jnp.float32),
        "b2":  scale * jax.random.normal(ks[6], (1, f), jnp.float32),
        "alpha": jnp.float32(0.1),
    }


if __name__ == "__main__":
    B, F, H, TED = 8, 32, 64, 16

    key = jax.random.PRNGKey(0)
    kp, kx, kh = jax.random.split(key, 3)
    params = make_params(kp, F, H, TED)
    x = jax.random.normal(kx, (B, F), jnp.float32)
    h0 = jax.random.normal(kh, (B, F), jnp.float32)
    t = 0.37

    prepped = prepare_params(params)

    # --- single RHS evaluation (ODEFunc.forward semantics) ---
    out = jax.block_until_ready(ode_func_forward(t, x, h0, prepped))
    ref = _reference(jnp.float32(t), x, h0, params)
    assert out.shape == (B, F)
    err = float(jnp.max(jnp.abs(out - ref)))
    # bf16 weights with f32 accumulation: relaxed tolerance vs. f32 reference.
    assert jnp.allclose(out, ref, atol=2e-2, rtol=2e-2), err

    # --- solver-style loop: state kept padded across two fused RK4 steps ---
    dt = 0.05
    x_p = pad_state(x, prepped)
    h0_p = pad_state(h0, prepped)
    x_jax = x
    tt = t
    for _ in range(2):
        x_p = ode_rk4_step_padded(tt, dt, x_p, h0_p, prepped)
        x_jax = _rk4_reference(jnp.float32(tt), jnp.float32(dt), x_jax, h0, params)
        tt = tt + dt
    x_out = jax.block_until_ready(unpad_state(x_p, B, F))
    err_rk4 = float(jnp.max(jnp.abs(x_out - x_jax)))
    assert jnp.allclose(x_out, x_jax, atol=2e-2, rtol=2e-2), err_rk4

    print("KERNEL_OK")
</pallas_src>

<mosaic_0001>
module attributes {stable_mosaic.version = 11 : i64} {
  func.func @_probe_copy_kernel(%arg0: i32, %arg1: memref<8x128xf32, #tpu.memory_space<vmem>>, %arg2: memref<8x128xf32, #tpu.memory_space<vmem>>) attributes {dimension_semantics = [#tpu.dimension_semantics<arbitrary>], iteration_bounds = array<i64: 1>, scalar_prefetch = 0 : i64, scratch_operands = 0 : i64, tpu.core_type = #tpu.core_type<tc>, window_params = [{pipeline_mode = #tpu.pipeline_mode<synchronous>, transform_indices = @transform_0, window_bounds = array<i64: 8, 128>}, {pipeline_mode = #tpu.pipeline_mode<synchronous>, transform_indices = @transform_1, window_bounds = array<i64: 8, 128>}]} {
    %c0 = arith.constant 0 : index
    %c0_0 = arith.constant 0 : index
    %0 = vector.load %arg1[%c0, %c0_0] : memref<8x128xf32, #tpu.memory_space<vmem>>, vector<8x128xf32>
    %c0_1 = arith.constant 0 : index
    %c0_2 = arith.constant 0 : index
    %1 = vector.load %arg2[%c0_1, %c0_2] : memref<8x128xf32, #tpu.memory_space<vmem>>, vector<8x128xf32>
    tpu.vector_store %arg2[%c0_1, %c0_2], %0 {strides = array<i32>} : memref<8x128xf32, #tpu.memory_space<vmem>>, vector<8x128xf32>,
    return
  }
  func.func @transform_0(%arg0: i32) -> (i32, i32) {
    %c0_i32 = arith.constant 0 : i32
    %c0_i32_0 = arith.constant 0 : i32
    %c0_i32_1 = arith.constant 0 : i32
    return %c0_i32, %c0_i32_0 : i32, i32
  }
  func.func @transform_1(%arg0: i32) -> (i32, i32) {
    %c0_i32 = arith.constant 0 : i32
    %c0_i32_0 = arith.constant 0 : i32
    %c0_i32_1 = arith.constant 0 : i32
    return %c0_i32, %c0_i32_0 : i32, i32
  }
}

module attributes {stable_mosaic.version = 11 : i64} {
  func.func @_ode_kernel(%arg0: i32, %arg1: memref<2xf32, #tpu.memory_space<smem>>, %arg2: memref<8x128xf32, #tpu.memory_space<vmem>>, %arg3: memref<8x128xf32, #tpu.memory_space<vmem>>, %arg4: memref<128x128xbf16, #tpu.memory_space<vmem>>, %arg5: memref<2x128xf32, #tpu.memory_space<vmem>>, %arg6: memref<128x128xbf16, #tpu.memory_space<vmem>>, %arg7: memref<1x128xf32, #tpu.memory_space<vmem>>, %arg8: memref<8x128xf32, #tpu.memory_space<vmem>>) attributes {dimension_semantics = [#tpu.dimension_semantics<parallel>], iteration_bounds = array<i64: 1>, scalar_prefetch = 0 : i64, scratch_operands = 0 : i64, tpu.core_type = #tpu.core_type<tc>, window_params = [{transform_indices = @transform_0, window_bounds = array<i64: 2>}, {transform_indices = @transform_1, window_bounds = array<i64: 8, 128>}, {transform_indices = @transform_2, window_bounds = array<i64: 8, 128>}, {pipeline_mode = #tpu.pipeline_mode<synchronous>, transform_indices = @transform_3, window_bounds = array<i64: 128, 128>}, {pipeline_mode = #tpu.pipeline_mode<synchronous>, transform_indices = @transform_4, window_bounds = array<i64: 2, 128>}, {pipeline_mode = #tpu.pipeline_mode<synchronous>, transform_indices = @transform_5, window_bounds = array<i64: 128, 128>}, {pipeline_mode = #tpu.pipeline_mode<synchronous>, transform_indices = @transform_6, window_bounds = array<i64: 1, 128>}, {transform_indices = @transform_7, window_bounds = array<i64: 8, 128>}]} {
    %c0 = arith.constant 0 : index
    %0 = memref.load %arg1[%c0] : memref<2xf32, #tpu.memory_space<smem>>
    %c1 = arith.constant 1 : index
    %1 = memref.load %arg1[%c1] : memref<2xf32, #tpu.memory_space<smem>>
    %c0_0 = arith.constant 0 : index
    %c0_1 = arith.constant 0 : index
    %2 = vector.load %arg2[%c0_0, %c0_1] : memref<8x128xf32, #tpu.memory_space<vmem>>, vector<8x128xf32>
    %3 = arith.truncf %2 : vector<8x128xf32> to vector<8x128xbf16>
    %c0_2 = arith.constant 0 : index
    %c0_3 = arith.constant 0 : index
    %4 = vector.load %arg4[%c0_2, %c0_3] : memref<128x128xbf16, #tpu.memory_space<vmem>>, vector<128x128xbf16>
    %cst = arith.constant dense<0.000000e+00> : vector<8x128xf32>
    %5 = tpu.matmul %3, %4, %cst {dimension_numbers = #tpu.dot_dimension_numbers<[1], [0], [0], [1], [0, 0, 1, 1], [], []>} : vector<8x128xbf16>, vector<128x128xbf16>, vector<8x128xf32> -> vector<8x128xf32>
    %c0_4 = arith.constant 0 : index
    %c0_5 = arith.constant 0 : index
    %6 = vector.load %arg5[%c0_4, %c0_5] : memref<2x128xf32, #tpu.memory_space<vmem>>, vector<1x128xf32>
    %7 = vector.broadcast %0 : f32 to vector<1x128xf32>
    %8 = arith.mulf %7, %6 : vector<1x128xf32>
    %9 = vector.broadcast %8 : vector<1x128xf32> to vector<8x128xf32>
    %10 = arith.addf %5, %9 : vector<8x128xf32>
    %c1_6 = arith.constant 1 : index
    %c0_7 = arith.constant 0 : index
    %11 = vector.load %arg5[%c1_6, %c0_7] : memref<2x128xf32, #tpu.memory_space<vmem>>, vector<1x128xf32>
    %12 = vector.broadcast %11 : vector<1x128xf32> to vector<8x128xf32>
    %13 = arith.addf %10, %12 : vector<8x128xf32>
    %14 = math.tanh %13 : vector<8x128xf32>
    %15 = arith.truncf %14 : vector<8x128xf32> to vector<8x128xbf16>
    %c0_8 = arith.constant 0 : index
    %c0_9 = arith.constant 0 : index
    %16 = vector.load %arg6[%c0_8, %c0_9] : memref<128x128xbf16, #tpu.memory_space<vmem>>, vector<128x128xbf16>
    %cst_10 = arith.constant dense<0.000000e+00> : vector<8x128xf32>
    %17 = tpu.matmul %15, %16, %cst_10 {dimension_numbers = #tpu.dot_dimension_numbers<[1], [0], [0], [1], [0, 0, 1, 1], [], []>} : vector<8x128xbf16>, vector<128x128xbf16>, vector<8x128xf32> -> vector<8x128xf32>
    %c0_11 = arith.constant 0 : index
    %c0_12 = arith.constant 0 : index
    %18 = vector.load %arg7[%c0_11, %c0_12] : memref<1x128xf32, #tpu.memory_space<vmem>>, vector<1x128xf32>
    %19 = vector.broadcast %18 : vector<1x128xf32> to vector<8x128xf32>
    %20 = arith.addf %17, %19 : vector<8x128xf32>
    %c0_13 = arith.constant 0 : index
    %c0_14 = arith.constant 0 : index
    %21 = vector.load %arg3[%c0_13, %c0_14] : memref<8x128xf32, #tpu.memory_space<vmem>>, vector<8x128xf32>
    %c0_15 = arith.constant 0 : index
    %c0_16 = arith.constant 0 : index
    %22 = vector.load %arg2[%c0_15, %c0_16] : memref<8x128xf32, #tpu.memory_space<vmem>>, vector<8x128xf32>
    %23 = arith.subf %21, %22 : vector<8x128xf32>
    %24 = vector.broadcast %1 : f32 to vector<8x128xf32>
    %25 = arith.mulf %24, %23 : vector<8x128xf32>
    %26 = arith.addf %20, %25 : vector<8x128xf32>
    %c0_17 = arith.constant 0 : index
    %c0_18 = arith.constant 0 : index
    %27 = vector.load %arg8[%c0_17, %c0_18] : memref<8x128xf32, #tpu.memory_space<vmem>>, vector<8x128xf32>
    tpu.vector_store %arg8[%c0_17, %c0_18], %26 {strides = array<i32>} : memref<8x128xf32, #tpu.memory_space<vmem>>, vector<8x128xf32>,
    return
  }
  func.func @transform_0(%arg0: i32) -> i32 {
    %c0_i32 = arith.constant 0 : i32
    %c0_i32_0 = arith.constant 0 : i32
    return %c0_i32 : i32
  }
  func.func @transform_1(%arg0: i32) -> (i32, i32) {
    %c0_i32 = arith.constant 0 : i32
    %c0_i32_0 = arith.constant 0 : i32
    return %arg0, %c0_i32 : i32, i32
  }
  func.func @transform_2(%arg0: i32) -> (i32, i32) {
    %c0_i32 = arith.constant 0 : i32
    %c0_i32_0 = arith.constant 0 : i32
    return %arg0, %c0_i32 : i32, i32
  }
  func.func @transform_3(%arg0: i32) -> (i32, i32) {
    %c0_i32 = arith.constant 0 : i32
    %c0_i32_0 = arith.constant 0 : i32
    %c0_i32_1 = arith.constant 0 : i32
    return %c0_i32, %c0_i32_0 : i32, i32
  }
  func.func @transform_4(%arg0: i32) -> (i32, i32) {
    %c0_i32 = arith.constant 0 : i32
    %c0_i32_0 = arith.constant 0 : i32
    %c0_i32_1 = arith.constant 0 : i32
    return %c0_i32, %c0_i32_0 : i32, i32
  }
  func.func @transform_5(%arg0: i32) -> (i32, i32) {
    %c0_i32 = arith.constant 0 : i32
    %c0_i32_0 = arith.constant 0 : i32
    %c0_i32_1 = arith.constant 0 : i32
    return %c0_i32, %c0_i32_0 : i32, i32
  }
  func.func @transform_6(%arg0: i32) -> (i32, i32) {
    %c0_i32 = arith.constant 0 : i32
    %c0_i32_0 = arith.constant 0 : i32
    %c0_i32_1 = arith.constant 0 : i32
    return %c0_i32, %c0_i32_0 : i32, i32
  }
  func.func @transform_7(%arg0: i32) -> (i32, i32) {
    %c0_i32 = arith.constant 0 : i32
    %c0_i32_0 = arith.constant 0 : i32
    return %arg0, %c0_i32 : i32, i32
  }
}

</mosaic_0001>

<llo_original>
// kernel: tpu_custom_call.1
$region0: #{tpu_custom_call.1}
  #allocation0 [shape = 'u32[]', space=smem, size = 0x4, offset = 0x4, fixed_abs, tag = 'smem constant byte address 0x4 - core index']
  #allocation1 [shape = 'u32[144,128]{1,0:T(1,128)}', space=vmem, size = 0x12000, scoped, tag = 'internal scratch']
  %s0 = inlined_call_operand.hbm [shape: f32[8,128], index: 0, kind: input, shape index: {}]
  %s1 = inlined_call_operand.hbm [shape: f32[8,128], index: 1, kind: output, shape index: {}]
  %s2 = sld [smem:[#allocation0]]
  $region18: #{tpu_custom_call.1} parent=0
    _
  %s4 = ssub.s32 1, %s2
  %s5 = scalar_select 0, %s4, %s2
  $region1: #{tpu_custom_call.1} parent=0
    #allocation2 [shape = 'u8[4096]{0}', space=vmem, size = 0x1000, scoped, tag = 'input window, operand 0, single buffered']
    #allocation3 [shape = 's32[1]{0}', space=sflag, size = 0x4, scoped, tag = 'scoped memory for tpu_custom_call.1']
    #allocation4 [shape = 's32[1]{0}', space=sflag, size = 0x4, scoped, tag = 'scoped memory for tpu_custom_call.1']
    #allocation5 [shape = 'u8[4096]{0}', space=vmem, size = 0x1000, scoped, tag = 'output window, operand 0, single buffered']
    %6 = vsyncpa [#allocation3], 0
    %7 = vsyncpa [#allocation4], 0
    // Predicated region
    $region2: #{tpu_custom_call.1} parent=1 // pred_check
      _
    $region3: #{tpu_custom_call.1} parent=1 // pred_check_branch
      %9 = sbr.rel (0) target = $region5
    $region4: #{tpu_custom_call.1} parent=1 // pred_region
      %s11 = ssub.s32 128, 128
      %12 = vsyncadd [#allocation3], %s11
      %s14 = sshll.u32 [#allocation2], 4
      %s15 = int_to_ptr.vmem [resolvable:$true] %s14
      %17 = dma.hbm_to_vmem [thread:$0]  %s0, 128, %s15, [#allocation3]
    $region5: #{tpu_custom_call.1} parent=1 // pred_fallthru
      _
    // Predicated region
    $region6: #{tpu_custom_call.1} parent=1 // pred_check
      _
    $region7: #{tpu_custom_call.1} parent=1 // pred_check_branch
      %19 = sbr.rel (0) target = $region9
    $region8: #{tpu_custom_call.1} parent=1 // pred_region
      %20 = dma.done [#allocation3], 128
    $region9: #{tpu_custom_call.1} parent=1 // pred_fallthru
      _
    %v21 = vld [vmem:[#allocation2] sm:$0xff]
    %22 = vst [vmem:[#allocation5] sm:$0xff] %v21
    // Predicated region
    $region10: #{tpu_custom_call.1} parent=1 // pred_check
      _
    $region11: #{tpu_custom_call.1} parent=1 // pred_check_branch
      %24 = sbr.rel (0) target = $region13
    $region12: #{tpu_custom_call.1} parent=1 // pred_region
      %s26 = ssub.s32 128, 128
      %27 = vsyncadd [#allocation4], %s26
      %s29 = sshll.u32 [#allocation5], 4
      %s30 = int_to_ptr.vmem [resolvable:$true] %s29
      %32 = dma.vmem_to_hbm [thread:$0]  %s30, 128, %s1, [#allocation4]
    $region13: #{tpu_custom_call.1} parent=1 // pred_fallthru
      _
    // Predicated region
    $region14: #{tpu_custom_call.1} parent=1 // pred_check
      _
    $region15: #{tpu_custom_call.1} parent=1 // pred_check_branch
      %34 = sbr.rel (0) target = $region17
    $region16: #{tpu_custom_call.1} parent=1 // pred_region
      %35 = dma.done [#allocation4], 128
    $region17: #{tpu_custom_call.1} parent=1 // pred_fallthru
      _
    %36 = vsyncpa [#allocation3], 1
    %37 = vsyncpa [#allocation4], 1

// kernel: tpu_custom_call.1
$region0: #{tpu_custom_call.1}
  #allocation0 [shape = 'u32[]', space=smem, size = 0x4, offset = 0x4, fixed_abs, tag = 'smem constant byte address 0x4 - core index']
  #allocation1 [shape = 'u32[144,128]{1,0:T(1,128)}', space=vmem, size = 0x12000, scoped, tag = 'internal scratch']
  %s0 = inlined_call_operand.hbm [shape: f32[2], index: 0, kind: input, shape index: {}]
  %s1 = inlined_call_operand.hbm [shape: f32[8,128], index: 1, kind: input, shape index: {}]
  %s2 = inlined_call_operand.hbm [shape: f32[8,128], index: 2, kind: input, shape index: {}]
  %s3 = inlined_call_operand.hbm [shape: bf16[128,128], index: 3, kind: input, shape index: {}]
  %s4 = inlined_call_operand.vmem [shape: f32[2,128], index: 4, kind: input, shape index: {}]
  %s5 = inlined_call_operand.hbm [shape: bf16[128,128], index: 5, kind: input, shape index: {}]
  %s6 = inlined_call_operand.vmem [shape: f32[1,128], index: 6, kind: input, shape index: {}]
  %s7 = inlined_call_operand.hbm [shape: f32[8,128], index: 7, kind: output, shape index: {}]
  %s8 = sld [smem:[#allocation0]]
  $region58: #{tpu_custom_call.1} parent=0
    _
  %s10 = ssub.s32 1, %s8
  %s11 = scalar_select 0, %s10, %s8
  $region1: #{tpu_custom_call.1} parent=0
    #allocation2 [shape = 'u8[512]{0}', space=smem, size = 0x200, scoped, tag = 'input window, operand 0, single buffered']
    #allocation3 [shape = 's32[1]{0}', space=sflag, size = 0x4, scoped, tag = 'scoped memory for tpu_custom_call.1']
    #allocation4 [shape = 's32[1]{0}', space=sflag, size = 0x4, scoped, tag = 'scoped memory for tpu_custom_call.1']
    #allocation5 [shape = 's32[1]{0}', space=sflag, size = 0x4, scoped, tag = 'scoped memory for tpu_custom_call.1']
    #allocation6 [shape = 'u8[4096]{0}', space=vmem, size = 0x1000, scoped, tag = 'input window, operand 1, single buffered']
    #allocation7 [shape = 'u8[4096]{0}', space=vmem, size = 0x1000, scoped, tag = 'input window, operand 2, single buffered']
    #allocation8 [shape = 's32[1]{0}', space=sflag, size = 0x4, scoped, tag = 'scoped memory for tpu_custom_call.1']
    #allocation9 [shape = 'u8[32768]{0}', space=vmem, size = 0x8000, scoped, tag = 'input window, operand 3, single buffered']
    #allocation10 [shape = 'u8[32768]{0}', space=vmem, size = 0x8000, scoped, tag = 'input window, operand 5, single buffered']
    #allocation11 [shape = 's32[1]{0}', space=sflag, size = 0x4, scoped, tag = 'scoped memory for tpu_custom_call.1']
    #allocation12 [shape = 'u8[4096]{0}', space=vmem, size = 0x1000, scoped, tag = 'output window, operand 0, single buffered']
    %12 = vsyncpa [#allocation5], 0
    %13 = vsyncpa [#allocation3], 0
    %14 = vsyncpa [#allocation8], 0
    %15 = vsyncpa [#allocation11], 0
    %16 = vsyncpa [#allocation4], 0
    // Predicated region
    $region2: #{tpu_custom_call.1} parent=1 // pred_check
      _
    $region3: #{tpu_custom_call.1} parent=1 // pred_check_branch
      %18 = sbr.rel (0) target = $region5
    $region4: #{tpu_custom_call.1} parent=1 // pred_region
      %s20 = ssub.s32 16, 16
      %21 = vsyncadd [#allocation5], %s20
      %24 = dma.hbm_to_smem %s0, 16, [#allocation2], [#allocation5]
    $region5: #{tpu_custom_call.1} parent=1 // pred_fallthru
      _
    // Predicated region
    $region6: #{tpu_custom_call.1} parent=1 // pred_check
      _
    $region7: #{tpu_custom_call.1} parent=1 // pred_check_branch
      %26 = sbr.rel (0) target = $region9
    $region8: #{tpu_custom_call.1} parent=1 // pred_region
      %s28 = ssub.s32 128, 128
      %29 = vsyncadd [#allocation3], %s28
      %s31 = sshll.u32 [#allocation6], 4
      %s32 = int_to_ptr.vmem [resolvable:$true] %s31
      %34 = dma.hbm_to_vmem [thread:$0]  %s1, 128, %s32, [#allocation3]
    $region9: #{tpu_custom_call.1} parent=1 // pred_fallthru
      _
    // Predicated region
    $region10: #{tpu_custom_call.1} parent=1 // pred_check
      _
    $region11: #{tpu_custom_call.1} parent=1 // pred_check_branch
      %36 = sbr.rel (0) target = $region13
    $region12: #{tpu_custom_call.1} parent=1 // pred_region
      %s38 = ssub.s32 128, 128
      %39 = vsyncadd [#allocation8], %s38
      %s41 = sshll.u32 [#allocation7], 4
      %s42 = int_to_ptr.vmem [resolvable:$true] %s41
      %44 = dma.hbm_to_vmem [thread:$0]  %s2, 128, %s42, [#allocation8]
    $region13: #{tpu_custom_call.1} parent=1 // pred_fallthru
      _
    // Predicated region
    $region14: #{tpu_custom_call.1} parent=1 // pred_check
      _
    $region15: #{tpu_custom_call.1} parent=1 // pred_check_branch
      %46 = sbr.rel (0) target = $region17
    $region16: #{tpu_custom_call.1} parent=1 // pred_region
      %s48 = ssub.s32 1024, 1024
      %49 = vsyncadd [#allocation8], %s48
      %s50 = sshll.u32 [#allocation9], 4
      %s51 = int_to_ptr.vmem [resolvable:$true] %s50
      %56 = dma.hbm_to_vmem [thread:$0]  %s3, 1024, %s51, [#allocation8], 64, 64, 4
    $region17: #{tpu_custom_call.1} parent=1 // pred_fallthru
      _
    // Predicated region
    $region18: #{tpu_custom_call.1} parent=1 // pred_check
      _
    $region19: #{tpu_custom_call.1} parent=1 // pred_check_branch
      %58 = sbr.rel (0) target = $region21
    $region20: #{tpu_custom_call.1} parent=1 // pred_region
      _
    $region21: #{tpu_custom_call.1} parent=1 // pred_fallthru
      _
    // Predicated region
    $region22: #{tpu_custom_call.1} parent=1 // pred_check
      _
    $region23: #{tpu_custom_call.1} parent=1 // pred_check_branch
      %60 = sbr.rel (0) target = $region25
    $region24: #{tpu_custom_call.1} parent=1 // pred_region
      %s62 = ssub.s32 1024, 1024
      %63 = vsyncadd [#allocation11], %s62
      %s64 = sshll.u32 [#allocation10], 4
      %s65 = int_to_ptr.vmem [resolvable:$true] %s64
      %70 = dma.hbm_to_vmem [thread:$0]  %s5, 1024, %s65, [#allocation11], 64, 64, 4
    $region25: #{tpu_custom_call.1} parent=1 // pred_fallthru
      _
    // Predicated region
    $region26: #{tpu_custom_call.1} parent=1 // pred_check
      _
    $region27: #{tpu_custom_call.1} parent=1 // pred_check_branch
      %72 = sbr.rel (0) target = $region29
    $region28: #{tpu_custom_call.1} parent=1 // pred_region
      _
    $region29: #{tpu_custom_call.1} parent=1 // pred_fallthru
      _
    // Predicated region
    $region30: #{tpu_custom_call.1} parent=1 // pred_check
      _
    $region31: #{tpu_custom_call.1} parent=1 // pred_check_branch
      %74 = sbr.rel (0) target = $region33
    $region32: #{tpu_custom_call.1} parent=1 // pred_region
      %75 = dma.done [#allocation5], 16
    $region33: #{tpu_custom_call.1} parent=1 // pred_fallthru
      _
    // Predicated region
    $region34: #{tpu_custom_call.1} parent=1 // pred_check
      _
    $region35: #{tpu_custom_call.1} parent=1 // pred_check_branch
      %77 = sbr.rel (0) target = $region37
    $region36: #{tpu_custom_call.1} parent=1 // pred_region
      %78 = dma.done [#allocation3], 128
    $region37: #{tpu_custom_call.1} parent=1 // pred_fallthru
      _
    // Predicated region
    $region38: #{tpu_custom_call.1} parent=1 // pred_check
      _
    $region39: #{tpu_custom_call.1} parent=1 // pred_check_branch
      %80 = sbr.rel (0) target = $region41
    $region40: #{tpu_custom_call.1} parent=1 // pred_region
      %81 = dma.done [#allocation8], 128
    $region41: #{tpu_custom_call.1} parent=1 // pred_fallthru
      _
    // Predicated region
    $region42: #{tpu_custom_call.1} parent=1 // pred_check
      _
    $region43: #{tpu_custom_call.1} parent=1 // pred_check_branch
      %83 = sbr.rel (0) target = $region45
    $region44: #{tpu_custom_call.1} parent=1 // pred_region
      %84 = dma.done [#allocation8], 1024
    $region45: #{tpu_custom_call.1} parent=1 // pred_fallthru
      _
    // Predicated region
    $region46: #{tpu_custom_call.1} parent=1 // pred_check
      _
    $region47: #{tpu_custom_call.1} parent=1 // pred_check_branch
      %86 = sbr.rel (0) target = $region49
    $region48: #{tpu_custom_call.1} parent=1 // pred_region
      %87 = dma.done [#allocation11], 1024
    $region49: #{tpu_custom_call.1} parent=1 // pred_fallthru
      _
    %88 = sfence
    %s90 = sld [smem:[#allocation2]]
    %s91 = sld [smem:[#allocation2 + $0x1]]
    %v92 = vld [vmem:[#allocation6] sm:$0xff]
    %v93 = vpack.c.bf16 %v92, %v92
    %v94 = vld [vmem:[#allocation9] sm:$0xf]
    %v95 = vld [vmem:[#allocation9 + $0x4] sm:$0xf]
    %v96 = vld [vmem:[#allocation9 + $0x8] sm:$0xf]
    %v97 = vld [vmem:[#allocation9 + $0xc] sm:$0xf]
    %v98 = vld [vmem:[#allocation9 + $0x10] sm:$0xf]
    %v99 = vld [vmem:[#allocation9 + $0x14] sm:$0xf]
    %v100 = vld [vmem:[#allocation9 + $0x18] sm:$0xf]
    %v101 = vld [vmem:[#allocation9 + $0x1c] sm:$0xf]
    %v102 = vld [vmem:[#allocation9 + $0x20] sm:$0xf]
    %v103 = vld [vmem:[#allocation9 + $0x24] sm:$0xf]
    %v104 = vld [vmem:[#allocation9 + $0x28] sm:$0xf]
    %v105 = vld [vmem:[#allocation9 + $0x2c] sm:$0xf]
    %v106 = vld [vmem:[#allocation9 + $0x30] sm:$0xf]
    %v107 = vld [vmem:[#allocation9 + $0x34] sm:$0xf]
    %v108 = vld [vmem:[#allocation9 + $0x38] sm:$0xf]
    %v109 = vld [vmem:[#allocation9 + $0x3c] sm:$0xf]
    %v110 = vld [vmem:[%s4] sm:$0x1]
    %v111 = vstv %s90
    %v112 = vmul.f32 %v111, %v110
    %v113 = vlaneseq
    %v114 = vshrl.u32 %v113, 7
    %v115 = vsub.s32 0, %v114
    %v116 = vrot.slane %v112, %v115
    %v133 = vunpack.c.l.b16 %v94
    %v134 = vunpack.c.l.b16 %v95
    %v135 = vunpack.c.l.b16 %v96
    %v136 = vunpack.c.l.b16 %v97
    %v137 = vunpack.c.l.b16 %v98
    %v138 = vunpack.c.l.b16 %v99
    %v139 = vunpack.c.l.b16 %v100
    %v140 = vunpack.c.l.b16 %v101
    %v141 = vunpack.c.l.b16 %v102
    %v142 = vunpack.c.l.b16 %v103
    %v143 = vunpack.c.l.b16 %v104
    %v144 = vunpack.c.l.b16 %v105
    %v145 = vunpack.c.l.b16 %v106
    %v146 = vunpack.c.l.b16 %v107
    %v147 = vunpack.c.l.b16 %v108
    %v148 = vunpack.c.l.b16 %v109
    %v149 = vpack.c.b16 %v134, %v133
    %v150 = vpack.c.b16 %v136, %v135
    %v151 = vpack.c.b16 %v138, %v137
    %v152 = vpack.c.b16 %v140, %v139
    %v153 = vpack.c.b16 %v142, %v141
    %v154 = vpack.c.b16 %v144, %v143
    %v155 = vpack.c.b16 %v146, %v145
    %v156 = vpack.c.b16 %v148, %v147
    %165 = vmatprep.subr.bf16.mxu0 0
    %166 = vmatpush1.bf16.msra.mxu0 %v156
    %167 = vmatprep.subr.bf16.mxu0 0
    %168 = vmatpush1.bf16.msra.mxu0 %v155
    %169 = vmatprep.subr.bf16.mxu0 0
    %170 = vmatpush1.bf16.msra.mxu0 %v154
    %171 = vmatprep.subr.bf16.mxu0 0
    %172 = vmatpush1.bf16.msra.mxu0 %v153
    %173 = vmatprep.subr.bf16.mxu0 0
    %174 = vmatpush1.bf16.msra.mxu0 %v152
    %175 = vmatprep.subr.bf16.mxu0 0
    %176 = vmatpush1.bf16.msra.mxu0 %v151
    %177 = vmatprep.subr.bf16.mxu0 0
    %178 = vmatpush1.bf16.msra.mxu0 %v150
    %179 = vmatprep.subr.bf16.mxu0 0
    %180 = vmatpush1.bf16.msra.mxu0 %v149
    %181 = vmatprep.subr.bf16.mxu0 0
    %182 = vmatpush2.bf16.msra.mxu0 0
    %183 = vmatprep.subr.bf16.mxu0 0
    %184 = vmatpush2.bf16.msra.mxu0 0
    %185 = vmatprep.subr.bf16.mxu0 0
    %186 = vmatpush2.bf16.msra.mxu0 0
    %187 = vmatprep.subr.bf16.mxu0 0
    %188 = vmatpush2.bf16.msra.mxu0 0
    %189 = vmatprep.subr.bf16.mxu0 0
    %190 = vmatpush2.bf16.msra.mxu0 0
    %191 = vmatprep.subr.bf16.mxu0 0
    %192 = vmatpush2.bf16.msra.mxu0 0
    %193 = vmatprep.subr.bf16.mxu0 0
    %194 = vmatpush2.bf16.msra.mxu0 0
    %195 = vmatprep.subr.bf16.mxu0 0
    %196 = vmatpush2.bf16.msra.mxu0 0
    %197 = vmatprep.mubr.bf16.mxu0 0
    %198 = vmatmul.mubr.bf16.gmra.mxu0 %v93
    %v199 = vpop.f32.mrf.mxu0
    %v200 = vadd.f32 %v116, %v199
    %v201 = vpop.f32.mrf.mxu0
    %v202 = vpop.f32.mrf.mxu0
    %v203 = vpop.f32.mrf.mxu0
    %204 = vdwg.mxu0
    %v205 = vld [vmem:[%s4 + $0x1] sm:$0x1]
    %v206 = vlaneseq
    %v207 = vshrl.u32 %v206, 7
    %v208 = vsub.s32 0, %v207
    %v209 = vrot.slane %v205, %v208
    %v210 = vadd.f32 %v200, %v209
    %v211 = vtanh.pop %v210
    %v212 = vpack.c.bf16 %v211, %v211
    %v213 = vld [vmem:[#allocation10] sm:$0xf]
    %v214 = vld [vmem:[#allocation10 + $0x4] sm:$0xf]
    %v215 = vld [vmem:[#allocation10 + $0x8] sm:$0xf]
    %v216 = vld [vmem:[#allocation10 + $0xc] sm:$0xf]
    %v217 = vld [vmem:[#allocation10 + $0x10] sm:$0xf]
    %v218 = vld [vmem:[#allocation10 + $0x14] sm:$0xf]
    %v219 = vld [vmem:[#allocation10 + $0x18] sm:$0xf]
    %v220 = vld [vmem:[#allocation10 + $0x1c] sm:$0xf]
    %v221 = vld [vmem:[#allocation10 + $0x20] sm:$0xf]
    %v222 = vld [vmem:[#allocation10 + $0x24] sm:$0xf]
    %v223 = vld [vmem:[#allocation10 + $0x28] sm:$0xf]
    %v224 = vld [vmem:[#allocation10 + $0x2c] sm:$0xf]
    %v225 = vld [vmem:[#allocation10 + $0x30] sm:$0xf]
    %v226 = vld [vmem:[#allocation10 + $0x34] sm:$0xf]
    %v227 = vld [vmem:[#allocation10 + $0x38] sm:$0xf]
    %v228 = vld [vmem:[#allocation10 + $0x3c] sm:$0xf]
    %v229 = vld [vmem:[%s6] sm:$0x1]
    %v231 = vlaneseq
    %v232 = vshrl.u32 %v231, 7
    %v233 = vsub.s32 0, %v232
    %v234 = vrot.slane %v229, %v233
    %v252 = vunpack.c.l.b16 %v213
    %v253 = vunpack.c.l.b16 %v214
    %v254 = vunpack.c.l.b16 %v215
    %v255 = vunpack.c.l.b16 %v216
    %v256 = vunpack.c.l.b16 %v217
    %v257 = vunpack.c.l.b16 %v218
    %v258 = vunpack.c.l.b16 %v219
    %v259 = vunpack.c.l.b16 %v220
    %v260 = vunpack.c.l.b16 %v221
    %v261 = vunpack.c.l.b16 %v222
    %v262 = vunpack.c.l.b16 %v223
    %v263 = vunpack.c.l.b16 %v224
    %v264 = vunpack.c.l.b16 %v225
    %v265 = vunpack.c.l.b16 %v226
    %v266 = vunpack.c.l.b16 %v227
    %v267 = vunpack.c.l.b16 %v228
    %v268 = vpack.c.b16 %v253, %v252
    %v269 = vpack.c.b16 %v255, %v254
    %v270 = vpack.c.b16 %v257, %v256
    %v271 = vpack.c.b16 %v259, %v258
    %v272 = vpack.c.b16 %v261, %v260
    %v273 = vpack.c.b16 %v263, %v262
    %v274 = vpack.c.b16 %v265, %v264
    %v275 = vpack.c.b16 %v267, %v266
    %284 = vmatprep.subr.bf16.mxu0 0
    %285 = vmatpush1.bf16.msra.mxu0 %v275
    %286 = vmatprep.subr.bf16.mxu0 0
    %287 = vmatpush1.bf16.msra.mxu0 %v274
    %288 = vmatprep.subr.bf16.mxu0 0
    %289 = vmatpush1.bf16.msra.mxu0 %v273
    %290 = vmatprep.subr.bf16.mxu0 0
    %291 = vmatpush1.bf16.msra.mxu0 %v272
    %292 = vmatprep.subr.bf16.mxu0 0
    %293 = vmatpush1.bf16.msra.mxu0 %v271
    %294 = vmatprep.subr.bf16.mxu0 0
    %295 = vmatpush1.bf16.msra.mxu0 %v270
    %296 = vmatprep.subr.bf16.mxu0 0
    %297 = vmatpush1.bf16.msra.mxu0 %v269
    %298 = vmatprep.subr.bf16.mxu0 0
    %299 = vmatpush1.bf16.msra.mxu0 %v268
    %300 = vmatprep.subr.bf16.mxu0 0
    %301 = vmatpush2.bf16.msra.mxu0 0
    %302 = vmatprep.subr.bf16.mxu0 0
    %303 = vmatpush2.bf16.msra.mxu0 0
    %304 = vmatprep.subr.bf16.mxu0 0
    %305 = vmatpush2.bf16.msra.mxu0 0
    %306 = vmatprep.subr.bf16.mxu0 0
    %307 = vmatpush2.bf16.msra.mxu0 0
    %308 = vmatprep.subr.bf16.mxu0 0
    %309 = vmatpush2.bf16.msra.mxu0 0
    %310 = vmatprep.subr.bf16.mxu0 0
    %311 = vmatpush2.bf16.msra.mxu0 0
    %312 = vmatprep.subr.bf16.mxu0 0
    %313 = vmatpush2.bf16.msra.mxu0 0
    %314 = vmatprep.subr.bf16.mxu0 0
    %315 = vmatpush2.bf16.msra.mxu0 0
    %316 = vmatprep.mubr.bf16.mxu0 0
    %317 = vmatmul.mubr.bf16.gmra.mxu0 %v212
    %v318 = vpop.f32.mrf.mxu0
    %v319 = vadd.f32 %v234, %v318
    %v320 = vpop.f32.mrf.mxu0
    %v321 = vpop.f32.mrf.mxu0
    %v322 = vpop.f32.mrf.mxu0
    %323 = vdwg.mxu0
    %v324 = vld [vmem:[#allocation7] sm:$0xff]
    %v325 = vsub.f32 %v324, %v92
    %v326 = vstv %s91
    %v327 = vmul.f32 %v326, %v325
    %v328 = vadd.f32 %v319, %v327
    %329 = vst [vmem:[#allocation12] sm:$0xff] %v328
    // Predicated region
    $region50: #{tpu_custom_call.1} parent=1 // pred_check
      _
    $region51: #{tpu_custom_call.1} parent=1 // pred_check_branch
      %331 = sbr.rel (0) target = $region53
    $region52: #{tpu_custom_call.1} parent=1 // pred_region
      %s333 = ssub.s32 128, 128
      %334 = vsyncadd [#allocation4], %s333
      %s336 = sshll.u32 [#allocation12], 4
      %s337 = int_to_ptr.vmem [resolvable:$true] %s336
      %339 = dma.vmem_to_hbm [thread:$0]  %s337, 128, %s7, [#allocation4]
    $region53: #{tpu_custom_call.1} parent=1 // pred_fallthru
      _
    // Predicated region
    $region54: #{tpu_custom_call.1} parent=1 // pred_check
      _
    $region55: #{tpu_custom_call.1} parent=1 // pred_check_branch
      %341 = sbr.rel (0) target = $region57
    $region56: #{tpu_custom_call.1} parent=1 // pred_region
      %342 = dma.done [#allocation4], 128
    $region57: #{tpu_custom_call.1} parent=1 // pred_fallthru
      _
    %343 = vsyncpa [#allocation3], 1
    %344 = vsyncpa [#allocation8], 1
    %345 = vsyncpa [#allocation11], 1
    %346 = vsyncpa [#allocation4], 1
    %347 = vsyncpa [#allocation5], 1

</llo_original>
